<compile_context>
chip_gen: v6e
topology: v6e:2x2x1
jax: 0.10.0
libtpu: 0.0.40
codegen_flags: <defaults>
</compile_context>

<pallas_src>
import jax
import jax.numpy as jnp
from jax.experimental import pallas as pl
from jax.experimental.pallas import tpu as pltpu

EMBEDDING_SIZE = 32
HEAD_SIZE = 16
BATCH = 2
SEQ_LEN = 8


def _masked_attention_kernel(x_ref, wqkv_ref, bqkv_ref, o_ref):
    B, T, E = x_ref.shape
    H = o_ref.shape[-1]

    # Fused QKV projection on all B*T rows at once.
    x2d = x_ref[...].reshape(B * T, E).astype(jnp.float32)            # (B*T, E)
    qkv = jnp.dot(x2d, wqkv_ref[...],
                  preferred_element_type=jnp.float32) + bqkv_ref[...]  # (B*T, 3H)
    qkv = qkv.reshape(B, T, 3 * H)
    q = qkv[:, :, 0:H]                                                 # (B, T, H)
    k = qkv[:, :, H:2 * H]
    v = qkv[:, :, 2 * H:3 * H]

    # Scaled dot-product scores; contract last dims directly (no k transpose).
    scale = jnp.float32(1.0 / (H ** 0.5))
    s = jax.lax.dot_general(
        q, k,
        dimension_numbers=(((2,), (2,)), ((0,), (0,))),
        preferred_element_type=jnp.float32) * scale                    # (B, T, T)

    # Causal mask computed once, broadcast over batch.
    row = jax.lax.broadcasted_iota(jnp.int32, (T, T), 0)
    col = jax.lax.broadcasted_iota(jnp.int32, (T, T), 1)
    causal = (row >= col)[None, :, :]                                  # (1, T, T)
    s = jnp.where(causal, s, jnp.float32(-1e30))

    # Numerically stable softmax; reciprocal on the EUP slot.
    m = jnp.max(s, axis=-1, keepdims=True)
    p = jnp.exp(s - m)
    denom = jnp.sum(p, axis=-1, keepdims=True)
    p = p * pl.reciprocal(denom, approx=True)

    # Weighted sum of values: (B, T, T) @ (B, T, H) -> (B, T, H).
    out = jax.lax.dot_general(
        p, v,
        dimension_numbers=(((2,), (1,)), ((0,), (0,))),
        preferred_element_type=jnp.float32)
    o_ref[...] = out.astype(o_ref.dtype)


def masked_attention_head(x, wq, bq, wk, bk, wv, bv):
    """x: (B, T, E). Weights: (E, H). Biases: (1, H). Returns (B, T, H)."""
    B, T, E = x.shape
    H = wq.shape[1]

    # Fuse the three projections into one weight / bias.
    w_qkv = jnp.concatenate([wq, wk, wv], axis=1)   # (E, 3H)
    b_qkv = jnp.concatenate([bq, bk, bv], axis=1)   # (1, 3H)

    return pl.pallas_call(
        _masked_attention_kernel,
        out_shape=jax.ShapeDtypeStruct((B, T, H), jnp.float32),
        grid_spec=pltpu.PrefetchScalarGridSpec(
            num_scalar_prefetch=0,
            grid=(1,),  # single invocation: whole problem is one block
            in_specs=[
                pl.BlockSpec((B, T, E), lambda i: (0, 0, 0)),      # x
                pl.BlockSpec((E, 3 * H), lambda i: (0, 0)),        # fused W_qkv
                pl.BlockSpec((1, 3 * H), lambda i: (0, 0)),        # fused b_qkv
            ],
            out_specs=pl.BlockSpec((B, T, H), lambda i: (0, 0, 0)),
        ),
        compiler_params=pltpu.CompilerParams(
            dimension_semantics=("arbitrary",)),
    )(x, w_qkv, b_qkv)


def _reference(x, wq, bq, wk, bk, wv, bv):
    q = x @ wq + bq
    k = x @ wk + bk
    v = x @ wv + bv
    s = (q @ jnp.swapaxes(k, -2, -1)) / (HEAD_SIZE ** 0.5)
    T = x.shape[1]
    mask = jnp.tril(jnp.ones((T, T)))[None]
    s = jnp.where(mask == 0, -jnp.inf, s)
    w = jax.nn.softmax(s, axis=-1)
    return w @ v


if __name__ == "__main__":
    key = jax.random.PRNGKey(0)
    kx, kq, kbq, kk, kbk, kv, kbv = jax.random.split(key, 7)

    x = jax.random.normal(kx, (BATCH, SEQ_LEN, EMBEDDING_SIZE), dtype=jnp.float32)

    # Deterministic parameter init (Linear: EMBEDDING_SIZE -> HEAD_SIZE).
    scale = 1.0 / (EMBEDDING_SIZE ** 0.5)
    wq = jax.random.uniform(kq, (EMBEDDING_SIZE, HEAD_SIZE), jnp.float32, -scale, scale)
    bq = jax.random.uniform(kbq, (1, HEAD_SIZE), jnp.float32, -scale, scale)
    wk = jax.random.uniform(kk, (EMBEDDING_SIZE, HEAD_SIZE), jnp.float32, -scale, scale)
    bk = jax.random.uniform(kbk, (1, HEAD_SIZE), jnp.float32, -scale, scale)
    wv = jax.random.uniform(kv, (EMBEDDING_SIZE, HEAD_SIZE), jnp.float32, -scale, scale)
    bv = jax.random.uniform(kbv, (1, HEAD_SIZE), jnp.float32, -scale, scale)

    out = masked_attention_head(x, wq, bq, wk, bk, wv, bv)
    out = jax.block_until_ready(out)

    ref = _reference(x, wq, bq, wk, bk, wv, bv)
    assert out.shape == (BATCH, SEQ_LEN, HEAD_SIZE)
    # Tolerance loosened slightly because the softmax denominator uses the
    # EUP approximate reciprocal (rel. err ~1e-4).
    assert jnp.allclose(out, ref, atol=2e-3, rtol=2e-3), "mismatch vs reference"

    print("KERNEL_OK")
</pallas_src>

<mosaic_0001>
module attributes {stable_mosaic.version = 11 : i64} {
  func.func @_masked_attention_kernel(%arg0: i32, %arg1: memref<2x8x32xf32, #tpu.memory_space<vmem>>, %arg2: memref<32x48xf32, #tpu.memory_space<vmem>>, %arg3: memref<1x48xf32, #tpu.memory_space<vmem>>, %arg4: memref<2x8x16xf32, #tpu.memory_space<vmem>>) attributes {dimension_semantics = [#tpu.dimension_semantics<arbitrary>], iteration_bounds = array<i64: 1>, scalar_prefetch = 0 : i64, scratch_operands = 0 : i64, tpu.core_type = #tpu.core_type<tc>, window_params = [{pipeline_mode = #tpu.pipeline_mode<synchronous>, transform_indices = @transform_0, window_bounds = array<i64: 2, 8, 32>}, {pipeline_mode = #tpu.pipeline_mode<synchronous>, transform_indices = @transform_1, window_bounds = array<i64: 32, 48>}, {pipeline_mode = #tpu.pipeline_mode<synchronous>, transform_indices = @transform_2, window_bounds = array<i64: 1, 48>}, {pipeline_mode = #tpu.pipeline_mode<synchronous>, transform_indices = @transform_3, window_bounds = array<i64: 2, 8, 16>}]} {
    %c0 = arith.constant 0 : index
    %c0_0 = arith.constant 0 : index
    %c0_1 = arith.constant 0 : index
    %0 = vector.load %arg1[%c0, %c0_0, %c0_1] : memref<2x8x32xf32, #tpu.memory_space<vmem>>, vector<2x8x32xf32>
    %1 = vector.shape_cast %0 : vector<2x8x32xf32> to vector<16x32xf32>
    %c0_2 = arith.constant 0 : index
    %c0_3 = arith.constant 0 : index
    %2 = vector.load %arg2[%c0_2, %c0_3] : memref<32x48xf32, #tpu.memory_space<vmem>>, vector<32x48xf32>
    %cst = arith.constant dense<0.000000e+00> : vector<16x48xf32>
    %3 = tpu.matmul %1, %2, %cst {dimension_numbers = #tpu.dot_dimension_numbers<[1], [0], [0], [1], [0, 0, 1, 1], [], []>} : vector<16x32xf32>, vector<32x48xf32>, vector<16x48xf32> -> vector<16x48xf32>
    %c0_4 = arith.constant 0 : index
    %c0_5 = arith.constant 0 : index
    %4 = vector.load %arg3[%c0_4, %c0_5] : memref<1x48xf32, #tpu.memory_space<vmem>>, vector<1x48xf32>
    %5 = vector.broadcast %4 : vector<1x48xf32> to vector<16x48xf32>
    %6 = arith.addf %3, %5 : vector<16x48xf32>
    %7 = vector.shape_cast %6 : vector<16x48xf32> to vector<2x8x48xf32>
    %8 = vector.extract_strided_slice %7 {offsets = [0, 0, 0], sizes = [2, 8, 16], strides = [1, 1, 1]} : vector<2x8x48xf32> to vector<2x8x16xf32>
    %9 = vector.extract_strided_slice %7 {offsets = [0, 0, 16], sizes = [2, 8, 16], strides = [1, 1, 1]} : vector<2x8x48xf32> to vector<2x8x16xf32>
    %10 = vector.extract_strided_slice %7 {offsets = [0, 0, 32], sizes = [2, 8, 16], strides = [1, 1, 1]} : vector<2x8x48xf32> to vector<2x8x16xf32>
    %cst_6 = arith.constant dense<0.000000e+00> : vector<2x8x8xf32>
    %11 = tpu.matmul %8, %9, %cst_6 {dimension_numbers = #tpu.dot_dimension_numbers<[2], [2], [1], [1], [0, 0, 0, 1, 1, 1], [0], [0]>} : vector<2x8x16xf32>, vector<2x8x16xf32>, vector<2x8x8xf32> -> vector<2x8x8xf32>
    %cst_7 = arith.constant 2.500000e-01 : f32
    %12 = vector.broadcast %cst_7 : f32 to vector<2x8x8xf32>
    %13 = arith.mulf %11, %12 : vector<2x8x8xf32>
    %14 = tpu.iota {dimensions = array<i32: 0>} : vector<8x8xi32>
    %15 = tpu.iota {dimensions = array<i32: 1>} : vector<8x8xi32>
    %16 = arith.cmpi sge, %14, %15 : vector<8x8xi32>
    %17 = vector.shape_cast %16 : vector<8x8xi1> to vector<1x8x8xi1>
    %cst_8 = arith.constant -1.000000e+30 : f32
    %18 = vector.shape_cast %17 : vector<1x8x8xi1> to vector<1x8x8xi1>
    %19 = vector.broadcast %18 : vector<1x8x8xi1> to vector<2x8x8xi1>
    %20 = vector.broadcast %cst_8 : f32 to vector<2x8x8xf32>
    %21 = arith.select %19, %13, %20 : vector<2x8x8xi1>, vector<2x8x8xf32>
    %cst_9 = arith.constant dense<0xFF800000> : vector<2x8xf32>
    %22 = vector.multi_reduction <maximumf>, %21, %cst_9 [2] : vector<2x8x8xf32> to vector<2x8xf32>
    %23 = vector.shape_cast %22 : vector<2x8xf32> to vector<2x8x1xf32>
    %24 = vector.broadcast %23 : vector<2x8x1xf32> to vector<2x8x8xf32>
    %25 = arith.subf %21, %24 : vector<2x8x8xf32>
    %26 = math.exp %25 : vector<2x8x8xf32>
    %cst_10 = arith.constant dense<0.000000e+00> : vector<2x8xf32>
    %27 = vector.multi_reduction <add>, %26, %cst_10 [2] : vector<2x8x8xf32> to vector<2x8xf32>
    %28 = vector.shape_cast %27 : vector<2x8xf32> to vector<2x8x1xf32>
    %29 = tpu.reciprocal %28 {approx = true} : vector<2x8x1xf32> -> vector<2x8x1xf32>
    %30 = vector.broadcast %29 : vector<2x8x1xf32> to vector<2x8x8xf32>
    %31 = arith.mulf %26, %30 : vector<2x8x8xf32>
    %cst_11 = arith.constant dense<0.000000e+00> : vector<2x8x16xf32>
    %32 = tpu.matmul %31, %10, %cst_11 {dimension_numbers = #tpu.dot_dimension_numbers<[2], [1], [1], [2], [0, 0, 0, 1, 1, 2], [0], [0]>} : vector<2x8x8xf32>, vector<2x8x16xf32>, vector<2x8x16xf32> -> vector<2x8x16xf32>
    %c0_12 = arith.constant 0 : index
    %c0_13 = arith.constant 0 : index
    %c0_14 = arith.constant 0 : index
    %33 = vector.load %arg4[%c0_12, %c0_13, %c0_14] : memref<2x8x16xf32, #tpu.memory_space<vmem>>, vector<2x8x16xf32>
    tpu.vector_store %arg4[%c0_12, %c0_13, %c0_14], %32 {strides = array<i32>} : memref<2x8x16xf32, #tpu.memory_space<vmem>>, vector<2x8x16xf32>,
    return
  }
  func.func @transform_0(%arg0: i32) -> (i32, i32, i32) {
    %c0_i32 = arith.constant 0 : i32
    %c0_i32_0 = arith.constant 0 : i32
    %c0_i32_1 = arith.constant 0 : i32
    %c0_i32_2 = arith.constant 0 : i32
    return %c0_i32, %c0_i32_0, %c0_i32_1 : i32, i32, i32
  }
  func.func @transform_1(%arg0: i32) -> (i32, i32) {
    %c0_i32 = arith.constant 0 : i32
    %c0_i32_0 = arith.constant 0 : i32
    %c0_i32_1 = arith.constant 0 : i32
    return %c0_i32, %c0_i32_0 : i32, i32
  }
  func.func @transform_2(%arg0: i32) -> (i32, i32) {
    %c0_i32 = arith.constant 0 : i32
    %c0_i32_0 = arith.constant 0 : i32
    %c0_i32_1 = arith.constant 0 : i32
    return %c0_i32, %c0_i32_0 : i32, i32
  }
  func.func @transform_3(%arg0: i32) -> (i32, i32, i32) {
    %c0_i32 = arith.constant 0 : i32
    %c0_i32_0 = arith.constant 0 : i32
    %c0_i32_1 = arith.constant 0 : i32
    %c0_i32_2 = arith.constant 0 : i32
    return %c0_i32, %c0_i32_0, %c0_i32_1 : i32, i32, i32
  }
}

</mosaic_0001>

<llo_original>
// kernel: tpu_custom_call.1
$region0: #{tpu_custom_call.1}
  #allocation0 [shape = 'u32[]', space=smem, size = 0x4, offset = 0x4, fixed_abs, tag = 'smem constant byte address 0x4 - core index']
  #allocation1 [shape = 'u32[144,128]{1,0:T(1,128)}', space=vmem, size = 0x12000, scoped, tag = 'internal scratch']
  %s0 = inlined_call_operand.hbm [shape: f32[2,8,32], index: 0, kind: input, shape index: {}]
  %s1 = inlined_call_operand.hbm [shape: f32[32,48], index: 1, kind: input, shape index: {}]
  %s2 = inlined_call_operand.vmem [shape: f32[1,48], index: 2, kind: input, shape index: {}]
  %s3 = inlined_call_operand.hbm [shape: f32[2,8,16], index: 3, kind: output, shape index: {}]
  %s4 = sld [smem:[#allocation0]]
  $region30: #{tpu_custom_call.1} parent=0
    _
  %s6 = ssub.s32 1, %s4
  %s7 = scalar_select 0, %s6, %s4
  $region1: #{tpu_custom_call.1} parent=0
    #allocation2 [shape = 'u8[8192]{0}', space=vmem, size = 0x2000, scoped, tag = 'input window, operand 0, single buffered']
    #allocation3 [shape = 's32[1]{0}', space=sflag, size = 0x4, scoped, tag = 'scoped memory for tpu_custom_call.1']
    #allocation4 [shape = 's32[1]{0}', space=sflag, size = 0x4, scoped, tag = 'scoped memory for tpu_custom_call.1']
    #allocation5 [shape = 'u8[16384]{0}', space=vmem, size = 0x4000, scoped, tag = 'input window, operand 1, single buffered']
    #allocation6 [shape = 's32[1]{0}', space=sflag, size = 0x4, scoped, tag = 'scoped memory for tpu_custom_call.1']
    #allocation7 [shape = 'u8[8192]{0}', space=vmem, size = 0x2000, scoped, tag = 'output window, operand 0, single buffered']
    %8 = vsyncpa [#allocation3], 0
    %9 = vsyncpa [#allocation6], 0
    %10 = vsyncpa [#allocation4], 0
    // Predicated region
    $region2: #{tpu_custom_call.1} parent=1 // pred_check
      _
    $region3: #{tpu_custom_call.1} parent=1 // pred_check_branch
      %12 = sbr.rel (0) target = $region5
    $region4: #{tpu_custom_call.1} parent=1 // pred_region
      %s14 = ssub.s32 256, 256
      %15 = vsyncadd [#allocation3], %s14
      %s16 = sshll.u32 [#allocation2], 4
      %s17 = int_to_ptr.vmem [resolvable:$true] %s16
      %22 = dma.hbm_to_vmem [thread:$0]  %s0, 256, %s17, [#allocation3], 128, 128, 8
    $region5: #{tpu_custom_call.1} parent=1 // pred_fallthru
      _
    // Predicated region
    $region6: #{tpu_custom_call.1} parent=1 // pred_check
      _
    $region7: #{tpu_custom_call.1} parent=1 // pred_check_branch
      %24 = sbr.rel (0) target = $region9
    $region8: #{tpu_custom_call.1} parent=1 // pred_region
      %s26 = ssub.s32 512, 512
      %27 = vsyncadd [#allocation6], %s26
      %s28 = sshll.u32 [#allocation5], 4
      %s29 = int_to_ptr.vmem [resolvable:$true] %s28
      %34 = dma.hbm_to_vmem [thread:$0]  %s1, 512, %s29, [#allocation6], 128, 128, 8
    $region9: #{tpu_custom_call.1} parent=1 // pred_fallthru
      _
    // Predicated region
    $region10: #{tpu_custom_call.1} parent=1 // pred_check
      _
    $region11: #{tpu_custom_call.1} parent=1 // pred_check_branch
      %36 = sbr.rel (0) target = $region13
    $region12: #{tpu_custom_call.1} parent=1 // pred_region
      _
    $region13: #{tpu_custom_call.1} parent=1 // pred_fallthru
      _
    // Predicated region
    $region14: #{tpu_custom_call.1} parent=1 // pred_check
      _
    $region15: #{tpu_custom_call.1} parent=1 // pred_check_branch
      %38 = sbr.rel (0) target = $region17
    $region16: #{tpu_custom_call.1} parent=1 // pred_region
      %39 = dma.done [#allocation3], 256
    $region17: #{tpu_custom_call.1} parent=1 // pred_fallthru
      _
    // Predicated region
    $region18: #{tpu_custom_call.1} parent=1 // pred_check
      _
    $region19: #{tpu_custom_call.1} parent=1 // pred_check_branch
      %41 = sbr.rel (0) target = $region21
    $region20: #{tpu_custom_call.1} parent=1 // pred_region
      %42 = dma.done [#allocation6], 512
    $region21: #{tpu_custom_call.1} parent=1 // pred_fallthru
      _
    %v43 = vld [vmem:[#allocation2] sm:$0xff]
    %v44 = vld [vmem:[#allocation2 + $0x8] sm:$0xff]
    %v45 = vld [vmem:[#allocation5] sm:$0xff]
    %v46 = vld [vmem:[#allocation5 + $0x8] sm:$0xff]
    %v47 = vld [vmem:[#allocation5 + $0x10] sm:$0xff]
    %v48 = vld [vmem:[#allocation5 + $0x18] sm:$0xff]
    %v49 = vld [vmem:[%s2] sm:$0x1]
    %v51 = vlaneseq
    %v52 = vshrl.u32 %v51, 7
    %v53 = vsub.s32 0, %v52
    %v54 = vrot.slane %v49, %v53
    %vm56 = vcmask 261120
    %v58 = vsel %vm56, %v43, 0
    %v61 = vsel %vm56, %v44, 0
    %63 = vmatprep.subr.mxu0 0.0
    %64 = vmatpush1.msra.mxu0 0.0
    %65 = vmatprep.subr.mxu0 0.0
    %66 = vmatpush1.msra.mxu0 0.0
    %67 = vmatprep.subr.mxu0 0.0
    %68 = vmatpush1.msra.mxu0 0.0
    %69 = vmatprep.subr.mxu0 0.0
    %70 = vmatpush1.msra.mxu0 0.0
    %71 = vmatprep.subr.mxu0 0.0
    %72 = vmatpush1.msra.mxu0 0.0
    %73 = vmatprep.subr.mxu0 0.0
    %74 = vmatpush1.msra.mxu0 0.0
    %75 = vmatprep.subr.mxu0 0.0
    %76 = vmatpush1.msra.mxu0 0.0
    %77 = vmatprep.subr.mxu0 0.0
    %78 = vmatpush1.msra.mxu0 0.0
    %79 = vmatprep.subr.mxu0 0.0
    %80 = vmatpush1.msra.mxu0 0.0
    %81 = vmatprep.subr.mxu0 0.0
    %82 = vmatpush1.msra.mxu0 0.0
    %83 = vmatprep.subr.mxu0 0.0
    %84 = vmatpush1.msra.mxu0 0.0
    %85 = vmatprep.subr.mxu0 0.0
    %86 = vmatpush1.msra.mxu0 0.0
    %87 = vmatprep.subr.mxu0 0.0
    %88 = vmatpush1.msra.mxu0 %v48
    %89 = vmatprep.subr.mxu0 0.0
    %90 = vmatpush1.msra.mxu0 %v47
    %91 = vmatprep.subr.mxu0 0.0
    %92 = vmatpush1.msra.mxu0 %v46
    %93 = vmatprep.subr.mxu0 0.0
    %94 = vmatpush1.msra.mxu0 %v45
    %95 = vmatprep.subr.mxu0 0.0
    %96 = vmatpush2.msra.mxu0 0.0
    %97 = vmatprep.subr.mxu0 0.0
    %98 = vmatpush2.msra.mxu0 0.0
    %99 = vmatprep.subr.mxu0 0.0
    %100 = vmatpush2.msra.mxu0 0.0
    %101 = vmatprep.subr.mxu0 0.0
    %102 = vmatpush2.msra.mxu0 0.0
    %103 = vmatprep.subr.mxu0 0.0
    %104 = vmatpush2.msra.mxu0 0.0
    %105 = vmatprep.subr.mxu0 0.0
    %106 = vmatpush2.msra.mxu0 0.0
    %107 = vmatprep.subr.mxu0 0.0
    %108 = vmatpush2.msra.mxu0 0.0
    %109 = vmatprep.subr.mxu0 0.0
    %110 = vmatpush2.msra.mxu0 0.0
    %111 = vmatprep.subr.mxu0 0.0
    %112 = vmatpush2.msra.mxu0 0.0
    %113 = vmatprep.subr.mxu0 0.0
    %114 = vmatpush2.msra.mxu0 0.0
    %115 = vmatprep.subr.mxu0 0.0
    %116 = vmatpush2.msra.mxu0 0.0
    %117 = vmatprep.subr.mxu0 0.0
    %118 = vmatpush2.msra.mxu0 0.0
    %119 = vmatprep.subr.mxu0 0.0
    %120 = vmatpush2.msra.mxu0 0.0
    %121 = vmatprep.subr.mxu0 0.0
    %122 = vmatpush2.msra.mxu0 0.0
    %123 = vmatprep.subr.mxu0 0.0
    %124 = vmatpush2.msra.mxu0 0.0
    %125 = vmatprep.subr.mxu0 0.0
    %126 = vmatpush2.msra.mxu0 0.0
    %127 = vmatprep.mubr.f32.mxu0 0.0
    %128 = vmatmul.mubr.f32.gmra.mxu0 %v58
    %v129 = vpop.f32.mrf.mxu0
    %v130 = vadd.f32 %v54, %v129
    %v131 = vpop.f32.mrf.mxu0
    %132 = vmatprep.mubr.f32.mxu0 0.0
    %133 = vmatmul.mubr.f32.gmra.mxu0 %v61
    %v134 = vpop.f32.mrf.mxu0
    %v135 = vadd.f32 %v54, %v134
    %v136 = vpop.f32.mrf.mxu0
    %137 = vdwg.mxu0
    %139 = vrot.lane.b32.xlu0 %v130, 112
    %v140 = vpop.permute.xlu0 %139
    %vm141 = vcmask 130048
    %v142 = vsel %vm141, %v130, 0
    %v144 = vsel %vm141, %v140, 0
    %146 = vmatprep.subr.mxu0 0.0
    %147 = vmatpush1.xpose.msra.mxu0 0.0
    %148 = vmatprep.subr.mxu0 0.0
    %149 = vmatpush1.xpose.msra.mxu0 0.0
    %150 = vmatprep.subr.mxu0 0.0
    %151 = vmatpush1.xpose.msra.mxu0 0.0
    %152 = vmatprep.subr.mxu0 0.0
    %153 = vmatpush1.xpose.msra.mxu0 0.0
    %154 = vmatprep.subr.mxu0 0.0
    %155 = vmatpush1.xpose.msra.mxu0 0.0
    %156 = vmatprep.subr.mxu0 0.0
    %157 = vmatpush1.xpose.msra.mxu0 0.0
    %158 = vmatprep.subr.mxu0 0.0
    %159 = vmatpush1.xpose.msra.mxu0 0.0
    %160 = vmatprep.subr.mxu0 0.0
    %161 = vmatpush1.xpose.msra.mxu0 0.0
    %162 = vmatprep.subr.mxu0 0.0
    %163 = vmatpush1.xpose.msra.mxu0 0.0
    %164 = vmatprep.subr.mxu0 0.0
    %165 = vmatpush1.xpose.msra.mxu0 0.0
    %166 = vmatprep.subr.mxu0 0.0
    %167 = vmatpush1.xpose.msra.mxu0 0.0
    %168 = vmatprep.subr.mxu0 0.0
    %169 = vmatpush1.xpose.msra.mxu0 0.0
    %170 = vmatprep.subr.mxu0 0.0
    %171 = vmatpush1.xpose.msra.mxu0 0.0
    %172 = vmatprep.subr.mxu0 0.0
    %173 = vmatpush1.xpose.msra.mxu0 0.0
    %174 = vmatprep.subr.mxu0 0.0
    %175 = vmatpush1.xpose.msra.mxu0 0.0
    %176 = vmatprep.subr.mxu0 0.0
    %177 = vmatpush1.xpose.msra.mxu0 %v144
    %178 = vmatprep.subr.mxu0 0.0
    %179 = vmatpush2.xpose.msra.mxu0 0.0
    %180 = vmatprep.subr.mxu0 0.0
    %181 = vmatpush2.xpose.msra.mxu0 0.0
    %182 = vmatprep.subr.mxu0 0.0
    %183 = vmatpush2.xpose.msra.mxu0 0.0
    %184 = vmatprep.subr.mxu0 0.0
    %185 = vmatpush2.xpose.msra.mxu0 0.0
    %186 = vmatprep.subr.mxu0 0.0
    %187 = vmatpush2.xpose.msra.mxu0 0.0
    %188 = vmatprep.subr.mxu0 0.0
    %189 = vmatpush2.xpose.msra.mxu0 0.0
    %190 = vmatprep.subr.mxu0 0.0
    %191 = vmatpush2.xpose.msra.mxu0 0.0
    %192 = vmatprep.subr.mxu0 0.0
    %193 = vmatpush2.xpose.msra.mxu0 0.0
    %194 = vmatprep.subr.mxu0 0.0
    %195 = vmatpush2.xpose.msra.mxu0 0.0
    %196 = vmatprep.subr.mxu0 0.0
    %197 = vmatpush2.xpose.msra.mxu0 0.0
    %198 = vmatprep.subr.mxu0 0.0
    %199 = vmatpush2.xpose.msra.mxu0 0.0
    %200 = vmatprep.subr.mxu0 0.0
    %201 = vmatpush2.xpose.msra.mxu0 0.0
    %202 = vmatprep.subr.mxu0 0.0
    %203 = vmatpush2.xpose.msra.mxu0 0.0
    %204 = vmatprep.subr.mxu0 0.0
    %205 = vmatpush2.xpose.msra.mxu0 0.0
    %206 = vmatprep.subr.mxu0 0.0
    %207 = vmatpush2.xpose.msra.mxu0 0.0
    %208 = vmatprep.subr.mxu0 0.0
    %209 = vmatpush2.xpose.msra.mxu0 0.0
    %210 = vmatprep.mubr.f32.mxu0 0.0
    %211 = vmatmul.mubr.f32.gmra.mxu0 %v142
    %v212 = vpop.f32.mrf.mxu0
    %v213 = vadd.f32 0.0, %v212
    %v214 = vpop.f32.mrf.mxu0
    %215 = vdwg.mxu0
    %217 = vrot.lane.b32.xlu0 %v135, 112
    %v218 = vpop.permute.xlu0 %217
    %v219 = vsel %vm141, %v135, 0
    %v221 = vsel %vm141, %v218, 0
    %223 = vmatprep.subr.mxu0 0.0
    %224 = vmatpush1.xpose.msra.mxu0 0.0
    %225 = vmatprep.subr.mxu0 0.0
    %226 = vmatpush1.xpose.msra.mxu0 0.0
    %227 = vmatprep.subr.mxu0 0.0
    %228 = vmatpush1.xpose.msra.mxu0 0.0
    %229 = vmatprep.subr.mxu0 0.0
    %230 = vmatpush1.xpose.msra.mxu0 0.0
    %231 = vmatprep.subr.mxu0 0.0
    %232 = vmatpush1.xpose.msra.mxu0 0.0
    %233 = vmatprep.subr.mxu0 0.0
    %234 = vmatpush1.xpose.msra.mxu0 0.0
    %235 = vmatprep.subr.mxu0 0.0
    %236 = vmatpush1.xpose.msra.mxu0 0.0
    %237 = vmatprep.subr.mxu0 0.0
    %238 = vmatpush1.xpose.msra.mxu0 0.0
    %239 = vmatprep.subr.mxu0 0.0
    %240 = vmatpush1.xpose.msra.mxu0 0.0
    %241 = vmatprep.subr.mxu0 0.0
    %242 = vmatpush1.xpose.msra.mxu0 0.0
    %243 = vmatprep.subr.mxu0 0.0
    %244 = vmatpush1.xpose.msra.mxu0 0.0
    %245 = vmatprep.subr.mxu0 0.0
    %246 = vmatpush1.xpose.msra.mxu0 0.0
    %247 = vmatprep.subr.mxu0 0.0
    %248 = vmatpush1.xpose.msra.mxu0 0.0
    %249 = vmatprep.subr.mxu0 0.0
    %250 = vmatpush1.xpose.msra.mxu0 0.0
    %251 = vmatprep.subr.mxu0 0.0
    %252 = vmatpush1.xpose.msra.mxu0 0.0
    %253 = vmatprep.subr.mxu0 0.0
    %254 = vmatpush1.xpose.msra.mxu0 %v221
    %255 = vmatprep.subr.mxu0 0.0
    %256 = vmatpush2.xpose.msra.mxu0 0.0
    %257 = vmatprep.subr.mxu0 0.0
    %258 = vmatpush2.xpose.msra.mxu0 0.0
    %259 = vmatprep.subr.mxu0 0.0
    %260 = vmatpush2.xpose.msra.mxu0 0.0
    %261 = vmatprep.subr.mxu0 0.0
    %262 = vmatpush2.xpose.msra.mxu0 0.0
    %263 = vmatprep.subr.mxu0 0.0
    %264 = vmatpush2.xpose.msra.mxu0 0.0
    %265 = vmatprep.subr.mxu0 0.0
    %266 = vmatpush2.xpose.msra.mxu0 0.0
    %267 = vmatprep.subr.mxu0 0.0
    %268 = vmatpush2.xpose.msra.mxu0 0.0
    %269 = vmatprep.subr.mxu0 0.0
    %270 = vmatpush2.xpose.msra.mxu0 0.0
    %271 = vmatprep.subr.mxu0 0.0
    %272 = vmatpush2.xpose.msra.mxu0 0.0
    %273 = vmatprep.subr.mxu0 0.0
    %274 = vmatpush2.xpose.msra.mxu0 0.0
    %275 = vmatprep.subr.mxu0 0.0
    %276 = vmatpush2.xpose.msra.mxu0 0.0
    %277 = vmatprep.subr.mxu0 0.0
    %278 = vmatpush2.xpose.msra.mxu0 0.0
    %279 = vmatprep.subr.mxu0 0.0
    %280 = vmatpush2.xpose.msra.mxu0 0.0
    %281 = vmatprep.subr.mxu0 0.0
    %282 = vmatpush2.xpose.msra.mxu0 0.0
    %283 = vmatprep.subr.mxu0 0.0
    %284 = vmatpush2.xpose.msra.mxu0 0.0
    %285 = vmatprep.subr.mxu0 0.0
    %286 = vmatpush2.xpose.msra.mxu0 0.0
    %287 = vmatprep.mubr.f32.mxu0 0.0
    %288 = vmatmul.mubr.f32.gmra.mxu0 %v219
    %v289 = vpop.f32.mrf.mxu0
    %v290 = vadd.f32 0.0, %v289
    %v291 = vpop.f32.mrf.mxu0
    %292 = vdwg.mxu0
    %v293 = vmul.f32 %v213, 0.25
    %v294 = vmul.f32 %v290, 0.25
    %v295 = vlaneseq
    %v296 = vshrl.u32 %v295, 7
    %v297 = vlaneseq
    %v298 = vand.u32 %v297, 127
    %vm299 = vcmp.ge.s32.totalorder %v296, %v298
    %v300 = vsel %vm299, 1, 0
    %vm301 = vcmp.eq.s32.totalorder %v300, 1
    %v302 = vsel %vm301, %v293, -1e+30
    %v303 = vsel %vm301, %v294, -1e+30
    %vm304 = vcmask 64512
    %v305 = vsel %vm304, %v302, -inf
    %306 = vmax.xlane.f32.xlu0 %v305
    %v307 = vpop.xlane.xlu0 %306
    %v308 = vsel %vm304, %v303, -inf
    %309 = vmax.xlane.f32.xlu0 %v308
    %v310 = vpop.xlane.xlu0 %309
    %v311 = vsub.f32 %v302, %v307
    %v312 = vsub.f32 %v303, %v310
    %v313 = vmul.f32 %v311, 1.442695
    %v314 = vpow.pop %v313
    %v315 = vmul.f32 %v312, 1.442695
    %v316 = vpow.pop %v315
    %v317 = vsel %vm304, %v314, 0.0
    %318 = vadd.xlane.f32.xlu0 %v317
    %v319 = vpop.xlane.xlu0 %318
    %v320 = vsel %vm304, %v316, 0.0
    %321 = vadd.xlane.f32.xlu0 %v320
    %v322 = vpop.xlane.xlu0 %321
    %v323 = vrcp.pop %v319
    %v324 = vrcp.pop %v322
    %v325 = vmul.f32 %v314, %v323
    %v326 = vmul.f32 %v316, %v324
    %327 = vrot.lane.b32.xlu0 %v130, 96
    %v328 = vpop.permute.xlu0 %327
    %v331 = vsel %vm304, %v325, 0
    %333 = vmatprep.subr.mxu0 0.0
    %334 = vmatpush1.msra.mxu0 0.0
    %335 = vmatprep.subr.mxu0 0.0
    %336 = vmatpush1.msra.mxu0 0.0
    %337 = vmatprep.subr.mxu0 0.0
    %338 = vmatpush1.msra.mxu0 0.0
    %339 = vmatprep.subr.mxu0 0.0
    %340 = vmatpush1.msra.mxu0 0.0
    %341 = vmatprep.subr.mxu0 0.0
    %342 = vmatpush1.msra.mxu0 0.0
    %343 = vmatprep.subr.mxu0 0.0
    %344 = vmatpush1.msra.mxu0 0.0
    %345 = vmatprep.subr.mxu0 0.0
    %346 = vmatpush1.msra.mxu0 0.0
    %347 = vmatprep.subr.mxu0 0.0
    %348 = vmatpush1.msra.mxu0 0.0
    %349 = vmatprep.subr.mxu0 0.0
    %350 = vmatpush1.msra.mxu0 0.0
    %351 = vmatprep.subr.mxu0 0.0
    %352 = vmatpush1.msra.mxu0 0.0
    %353 = vmatprep.subr.mxu0 0.0
    %354 = vmatpush1.msra.mxu0 0.0
    %355 = vmatprep.subr.mxu0 0.0
    %356 = vmatpush1.msra.mxu0 0.0
    %357 = vmatprep.subr.mxu0 0.0
    %358 = vmatpush1.msra.mxu0 0.0
    %359 = vmatprep.subr.mxu0 0.0
    %360 = vmatpush1.msra.mxu0 0.0
    %361 = vmatprep.subr.mxu0 0.0
    %362 = vmatpush1.msra.mxu0 0.0
    %363 = vmatprep.subr.mxu0 0.0
    %364 = vmatpush1.msra.mxu0 %v328
    %365 = vmatprep.subr.mxu0 0.0
    %366 = vmatpush2.msra.mxu0 0.0
    %367 = vmatprep.subr.mxu0 0.0
    %368 = vmatpush2.msra.mxu0 0.0
    %369 = vmatprep.subr.mxu0 0.0
    %370 = vmatpush2.msra.mxu0 0.0
    %371 = vmatprep.subr.mxu0 0.0
    %372 = vmatpush2.msra.mxu0 0.0
    %373 = vmatprep.subr.mxu0 0.0
    %374 = vmatpush2.msra.mxu0 0.0
    %375 = vmatprep.subr.mxu0 0.0
    %376 = vmatpush2.msra.mxu0 0.0
    %377 = vmatprep.subr.mxu0 0.0
    %378 = vmatpush2.msra.mxu0 0.0
    %379 = vmatprep.subr.mxu0 0.0
    %380 = vmatpush2.msra.mxu0 0.0
    %381 = vmatprep.subr.mxu0 0.0
    %382 = vmatpush2.msra.mxu0 0.0
    %383 = vmatprep.subr.mxu0 0.0
    %384 = vmatpush2.msra.mxu0 0.0
    %385 = vmatprep.subr.mxu0 0.0
    %386 = vmatpush2.msra.mxu0 0.0
    %387 = vmatprep.subr.mxu0 0.0
    %388 = vmatpush2.msra.mxu0 0.0
    %389 = vmatprep.subr.mxu0 0.0
    %390 = vmatpush2.msra.mxu0 0.0
    %391 = vmatprep.subr.mxu0 0.0
    %392 = vmatpush2.msra.mxu0 0.0
    %393 = vmatprep.subr.mxu0 0.0
    %394 = vmatpush2.msra.mxu0 0.0
    %395 = vmatprep.subr.mxu0 0.0
    %396 = vmatpush2.msra.mxu0 0.0
    %397 = vmatprep.mubr.f32.mxu0 0.0
    %398 = vmatmul.mubr.f32.gmra.mxu0 %v331
    %v399 = vpop.f32.mrf.mxu0
    %v400 = vadd.f32 0.0, %v399
    %v401 = vpop.f32.mrf.mxu0
    %402 = vdwg.mxu0
    %403 = vrot.lane.b32.xlu0 %v135, 96
    %v404 = vpop.permute.xlu0 %403
    %v407 = vsel %vm304, %v326, 0
    %409 = vmatprep.subr.mxu0 0.0
    %410 = vmatpush1.msra.mxu0 0.0
    %411 = vmatprep.subr.mxu0 0.0
    %412 = vmatpush1.msra.mxu0 0.0
    %413 = vmatprep.subr.mxu0 0.0
    %414 = vmatpush1.msra.mxu0 0.0
    %415 = vmatprep.subr.mxu0 0.0
    %416 = vmatpush1.msra.mxu0 0.0
    %417 = vmatprep.subr.mxu0 0.0
    %418 = vmatpush1.msra.mxu0 0.0
    %419 = vmatprep.subr.mxu0 0.0
    %420 = vmatpush1.msra.mxu0 0.0
    %421 = vmatprep.subr.mxu0 0.0
    %422 = vmatpush1.msra.mxu0 0.0
    %423 = vmatprep.subr.mxu0 0.0
    %424 = vmatpush1.msra.mxu0 0.0
    %425 = vmatprep.subr.mxu0 0.0
    %426 = vmatpush1.msra.mxu0 0.0
    %427 = vmatprep.subr.mxu0 0.0
    %428 = vmatpush1.msra.mxu0 0.0
    %429 = vmatprep.subr.mxu0 0.0
    %430 = vmatpush1.msra.mxu0 0.0
    %431 = vmatprep.subr.mxu0 0.0
    %432 = vmatpush1.msra.mxu0 0.0
    %433 = vmatprep.subr.mxu0 0.0
    %434 = vmatpush1.msra.mxu0 0.0
    %435 = vmatprep.subr.mxu0 0.0
    %436 = vmatpush1.msra.mxu0 0.0
    %437 = vmatprep.subr.mxu0 0.0
    %438 = vmatpush1.msra.mxu0 0.0
    %439 = vmatprep.subr.mxu0 0.0
    %440 = vmatpush1.msra.mxu0 %v404
    %441 = vmatprep.subr.mxu0 0.0
    %442 = vmatpush2.msra.mxu0 0.0
    %443 = vmatprep.subr.mxu0 0.0
    %444 = vmatpush2.msra.mxu0 0.0
    %445 = vmatprep.subr.mxu0 0.0
    %446 = vmatpush2.msra.mxu0 0.0
    %447 = vmatprep.subr.mxu0 0.0
    %448 = vmatpush2.msra.mxu0 0.0
    %449 = vmatprep.subr.mxu0 0.0
    %450 = vmatpush2.msra.mxu0 0.0
    %451 = vmatprep.subr.mxu0 0.0
    %452 = vmatpush2.msra.mxu0 0.0
    %453 = vmatprep.subr.mxu0 0.0
    %454 = vmatpush2.msra.mxu0 0.0
    %455 = vmatprep.subr.mxu0 0.0
    %456 = vmatpush2.msra.mxu0 0.0
    %457 = vmatprep.subr.mxu0 0.0
    %458 = vmatpush2.msra.mxu0 0.0
    %459 = vmatprep.subr.mxu0 0.0
    %460 = vmatpush2.msra.mxu0 0.0
    %461 = vmatprep.subr.mxu0 0.0
    %462 = vmatpush2.msra.mxu0 0.0
    %463 = vmatprep.subr.mxu0 0.0
    %464 = vmatpush2.msra.mxu0 0.0
    %465 = vmatprep.subr.mxu0 0.0
    %466 = vmatpush2.msra.mxu0 0.0
    %467 = vmatprep.subr.mxu0 0.0
    %468 = vmatpush2.msra.mxu0 0.0
    %469 = vmatprep.subr.mxu0 0.0
    %470 = vmatpush2.msra.mxu0 0.0
    %471 = vmatprep.subr.mxu0 0.0
    %472 = vmatpush2.msra.mxu0 0.0
    %473 = vmatprep.mubr.f32.mxu0 0.0
    %474 = vmatmul.mubr.f32.gmra.mxu0 %v407
    %v475 = vpop.f32.mrf.mxu0
    %v476 = vadd.f32 0.0, %v475
    %v477 = vpop.f32.mrf.mxu0
    %478 = vdwg.mxu0
    %479 = vst.msk [vmem:[#allocation7] sm:$0xff] %vm141, %v400
    %480 = vst.msk [vmem:[#allocation7 + $0x8] sm:$0xff] %vm141, %v476
    // Predicated region
    $region22: #{tpu_custom_call.1} parent=1 // pred_check
      _
    $region23: #{tpu_custom_call.1} parent=1 // pred_check_branch
      %482 = sbr.rel (0) target = $region25
    $region24: #{tpu_custom_call.1} parent=1 // pred_region
      %s484 = ssub.s32 256, 256
      %485 = vsyncadd [#allocation4], %s484
      %s486 = sshll.u32 [#allocation7], 4
      %s487 = int_to_ptr.vmem [resolvable:$true] %s486
      %492 = dma.vmem_to_hbm [thread:$0]  %s487, 256, %s3, [#allocation4], 128, 128, 8
    $region25: #{tpu_custom_call.1} parent=1 // pred_fallthru
      _
    // Predicated region
    $region26: #{tpu_custom_call.1} parent=1 // pred_check
      _
    $region27: #{tpu_custom_call.1} parent=1 // pred_check_branch
      %494 = sbr.rel (0) target = $region29
    $region28: #{tpu_custom_call.1} parent=1 // pred_region
      %495 = dma.done [#allocation4], 256
    $region29: #{tpu_custom_call.1} parent=1 // pred_fallthru
      _
    %496 = vsyncpa [#allocation3], 1
    %497 = vsyncpa [#allocation6], 1
    %498 = vsyncpa [#allocation4], 1

</llo_original>
